<compile_context>
chip_gen: v6e
topology: v6e:2x2x1
jax: 0.10.0
libtpu: 0.0.40
codegen_flags: <defaults>
</compile_context>

<pallas_src>
import functools

import jax
import jax.numpy as jnp
from jax.experimental import pallas as pl
from jax.experimental.pallas import tpu as pltpu


def _round_up(n, m):
    return ((n + m - 1) // m) * m


def _tensorcores_per_device():
    """TensorCores a single program's 'parallel' grid axis can shard across."""
    try:
        kind = getattr(jax.devices()[0], "device_kind", "").lower()
    except Exception:
        return 1
    # v7x exposes 2 TensorCores per chip to one program; v5e / v6e are single-TC.
    return 2 if "v7" in kind else 1


def _choose_batch_tiling(B, block_b, num_tc):
    """Pick (rows_per_tile, grid_steps) minimizing padding while keeping tiles MXU-friendly."""
    B8 = _round_up(B, 8)                       # sublane granularity
    steps = pl.cdiv(B8, block_b)
    if num_tc > 1 and B8 > 8 * num_tc:
        steps = _round_up(steps, num_tc)       # balanced work for megacore sharding (v7x)
    bb = _round_up(pl.cdiv(B8, steps), 8)      # minimal-padding, sublane-aligned tile
    bb128 = _round_up(bb, 128)
    if bb >= 128 and steps * (bb128 - bb) * 8 <= B8:
        bb = bb128                             # full 128-row MXU passes when padding is cheap
    steps = pl.cdiv(B8, bb)
    return bb, steps


def _mlp_kernel(x_ref, w1_ref, b1_ref, w2_ref, b2_ref, w3_ref, b3_ref, o_ref):
    # MXU operand dtype comes from the weights (f32, or bf16 on the fast path);
    # all accumulation and bias/ReLU math stays in f32 (PyTorch x.float() semantics).
    mxu_dtype = w1_ref.dtype
    x = x_ref[...].astype(mxu_dtype)

    h1 = jnp.dot(x, w1_ref[...], preferred_element_type=jnp.float32) + b1_ref[...]
    h1 = jnp.maximum(h1, 0.0).astype(mxu_dtype)

    h2 = jnp.dot(h1, w2_ref[...], preferred_element_type=jnp.float32) + b2_ref[...]
    h2 = jnp.maximum(h2, 0.0).astype(mxu_dtype)

    o_ref[...] = (jnp.dot(h2, w3_ref[...], preferred_element_type=jnp.float32)
                  + b3_ref[...]).astype(o_ref.dtype)


@functools.partial(jax.jit, static_argnames=("block_b", "compute_dtype"))
def prober_cifar100_forward(x, params, block_b=512, compute_dtype=jnp.float32):
    """Forward pass of ProberCIFAR100.

    x: any shape (B, ...) -- flattened to (B, num_hidden), like x.view(x.size(0), -1).
    params: w1 (H,512), b1 (512,), w2 (512,128), b2 (128,), w3 (128,2), b3 (2,)
            (weights stored (in_features, out_features), i.e. transposed vs. nn.Linear).
    block_b: cap on the batch tile (rounded to a multiple of 8; default 512).
    compute_dtype: MXU operand dtype.  f32 matches PyTorch exactly; jnp.bfloat16 enables the
                   fast MXU path with f32 accumulation (small numeric deviation).
    """
    block_b = _round_up(max(int(block_b), 8), 8)

    B = x.shape[0]
    x2d = jnp.reshape(x, (B, -1))
    H = x2d.shape[1]

    w1 = params["w1"].astype(compute_dtype)
    w2 = params["w2"].astype(compute_dtype)
    w3 = params["w3"].astype(compute_dtype)
    b1 = params["b1"].astype(jnp.float32).reshape(1, -1)
    b2 = params["b2"].astype(jnp.float32).reshape(1, -1)
    b3 = params["b3"].astype(jnp.float32).reshape(1, -1)

    if H != w1.shape[0]:
        raise ValueError(
            f"flattened feature dim {H} does not match w1.shape[0]={w1.shape[0]}")

    d1, d2, d3 = w1.shape[1], w2.shape[1], w3.shape[1]

    # On the bf16 path, cast x in the wrapper (also halves its HBM read traffic).
    # On the f32 path, keep x in its native HBM dtype and cast inside the kernel.
    if compute_dtype != jnp.float32:
        x2d = x2d.astype(compute_dtype)

    # Lane-dense output: zero-pad the 2-wide last layer to 128 output lanes so stores are
    # full vregs instead of masked 2-lane partial stores; the zero lanes are sliced off below.
    d3p = _round_up(d3, 128)
    w3p = jnp.pad(w3, ((0, 0), (0, d3p - d3)))
    b3p = jnp.pad(b3, ((0, 0), (0, d3p - d3)))

    # Generation-aware, pad-minimizing batch tiling.
    num_tc = _tensorcores_per_device()
    bb, steps = _choose_batch_tiling(B, block_b, num_tc)
    B_pad = bb * steps
    if B_pad != B:
        x2d = jnp.pad(x2d, ((0, B_pad - B), (0, 0)))

    out = pl.pallas_call(
        _mlp_kernel,
        out_shape=jax.ShapeDtypeStruct((B_pad, d3p), jnp.float32),
        grid_spec=pltpu.PrefetchScalarGridSpec(
            num_scalar_prefetch=0,
            grid=(steps,),
            in_specs=[
                pl.BlockSpec((bb, H), lambda i: (i, 0)),     # x tile
                pl.BlockSpec((H, d1), lambda i: (0, 0)),     # w1 (resident across grid)
                pl.BlockSpec((1, d1), lambda i: (0, 0)),     # b1
                pl.BlockSpec((d1, d2), lambda i: (0, 0)),    # w2
                pl.BlockSpec((1, d2), lambda i: (0, 0)),     # b2
                pl.BlockSpec((d2, d3p), lambda i: (0, 0)),   # w3 (lane-padded)
                pl.BlockSpec((1, d3p), lambda i: (0, 0)),    # b3 (lane-padded)
            ],
            out_specs=pl.BlockSpec((bb, d3p), lambda i: (i, 0)),
        ),
        compiler_params=pltpu.CompilerParams(
            dimension_semantics=("parallel",),
            vmem_limit_bytes=32 * 1024 * 1024,
        ),
    )(x2d, w1, b1, w2, b2, w3p, b3p)

    return out[:B, :d3]


def init_params(key, num_hidden=512):
    """Deterministic init matching nn.Linear default U(-1/sqrt(fan_in), +1/sqrt(fan_in))."""
    dims = [(num_hidden, 512), (512, 128), (128, 2)]
    params = {}
    for idx, (fan_in, fan_out) in enumerate(dims, start=1):
        key, kw, kb = jax.random.split(key, 3)
        bound = 1.0 / jnp.sqrt(jnp.float32(fan_in))
        params[f"w{idx}"] = jax.random.uniform(
            kw, (fan_in, fan_out), jnp.float32, minval=-bound, maxval=bound)
        params[f"b{idx}"] = jax.random.uniform(
            kb, (fan_out,), jnp.float32, minval=-bound, maxval=bound)
    return params


def reference_forward(x, params):
    x2d = jnp.reshape(x, (x.shape[0], -1)).astype(jnp.float32)
    h1 = jnp.maximum(x2d @ params["w1"] + params["b1"], 0.0)
    h2 = jnp.maximum(h1 @ params["w2"] + params["b2"], 0.0)
    return h2 @ params["w3"] + params["b3"]


if __name__ == "__main__":
    key = jax.random.PRNGKey(0)
    k_params, k_x1, k_x2 = jax.random.split(key, 3)

    num_hidden = 512   # module default: first layer is Linear(num_hidden, 512)
    params = init_params(k_params, num_hidden=num_hidden)

    # 1) f32 path, small non-aligned batch (exercises sublane padding, single grid step).
    x_small = jax.random.normal(k_x1, (10, num_hidden), jnp.float32)
    out = jax.block_until_ready(prober_cifar100_forward(x_small, params))
    ref = reference_forward(x_small, params)
    assert out.shape == (10, 2), out.shape
    assert jnp.allclose(out, ref, atol=1e-4, rtol=1e-4), "f32 path mismatch vs reference"

    # 2) bf16 MXU path, batch that is not a 128-multiple (exercises pad-minimizing tiling and
    #    the multi-step grid on 2-TC chips); f32 accumulation keeps the deviation tiny.
    x_big = jax.random.normal(k_x2, (260, num_hidden), jnp.float32)
    out_bf16 = jax.block_until_ready(
        prober_cifar100_forward(x_big, params, compute_dtype=jnp.bfloat16))
    ref_big = reference_forward(x_big, params)
    assert out_bf16.shape == (260, 2), out_bf16.shape
    assert float(jnp.max(jnp.abs(out_bf16 - ref_big))) < 5e-2, "bf16 path mismatch vs reference"

    print("KERNEL_OK")
</pallas_src>

<mosaic_0001>
module attributes {stable_mosaic.version = 11 : i64} {
  func.func @_mlp_kernel(%arg0: i32, %arg1: memref<16x512xf32, #tpu.memory_space<vmem>>, %arg2: memref<512x512xf32, #tpu.memory_space<vmem>>, %arg3: memref<1x512xf32, #tpu.memory_space<vmem>>, %arg4: memref<512x128xf32, #tpu.memory_space<vmem>>, %arg5: memref<1x128xf32, #tpu.memory_space<vmem>>, %arg6: memref<128x128xf32, #tpu.memory_space<vmem>>, %arg7: memref<1x128xf32, #tpu.memory_space<vmem>>, %arg8: memref<16x128xf32, #tpu.memory_space<vmem>>) attributes {dimension_semantics = [#tpu.dimension_semantics<parallel>], iteration_bounds = array<i64: 1>, scalar_prefetch = 0 : i64, scratch_operands = 0 : i64, tpu.core_type = #tpu.core_type<tc>, window_params = [{transform_indices = @transform_0, window_bounds = array<i64: 16, 512>}, {pipeline_mode = #tpu.pipeline_mode<synchronous>, transform_indices = @transform_1, window_bounds = array<i64: 512, 512>}, {pipeline_mode = #tpu.pipeline_mode<synchronous>, transform_indices = @transform_2, window_bounds = array<i64: 1, 512>}, {pipeline_mode = #tpu.pipeline_mode<synchronous>, transform_indices = @transform_3, window_bounds = array<i64: 512, 128>}, {pipeline_mode = #tpu.pipeline_mode<synchronous>, transform_indices = @transform_4, window_bounds = array<i64: 1, 128>}, {pipeline_mode = #tpu.pipeline_mode<synchronous>, transform_indices = @transform_5, window_bounds = array<i64: 128, 128>}, {pipeline_mode = #tpu.pipeline_mode<synchronous>, transform_indices = @transform_6, window_bounds = array<i64: 1, 128>}, {transform_indices = @transform_7, window_bounds = array<i64: 16, 128>}]} {
    %c0 = arith.constant 0 : index
    %c0_0 = arith.constant 0 : index
    %0 = vector.load %arg1[%c0, %c0_0] : memref<16x512xf32, #tpu.memory_space<vmem>>, vector<16x512xf32>
    %c0_1 = arith.constant 0 : index
    %c0_2 = arith.constant 0 : index
    %1 = vector.load %arg2[%c0_1, %c0_2] : memref<512x512xf32, #tpu.memory_space<vmem>>, vector<512x512xf32>
    %cst = arith.constant dense<0.000000e+00> : vector<16x512xf32>
    %2 = tpu.matmul %0, %1, %cst {dimension_numbers = #tpu.dot_dimension_numbers<[1], [0], [0], [1], [0, 0, 1, 1], [], []>} : vector<16x512xf32>, vector<512x512xf32>, vector<16x512xf32> -> vector<16x512xf32>
    %c0_3 = arith.constant 0 : index
    %c0_4 = arith.constant 0 : index
    %3 = vector.load %arg3[%c0_3, %c0_4] : memref<1x512xf32, #tpu.memory_space<vmem>>, vector<1x512xf32>
    %4 = vector.broadcast %3 : vector<1x512xf32> to vector<16x512xf32>
    %5 = arith.addf %2, %4 : vector<16x512xf32>
    %cst_5 = arith.constant 0.000000e+00 : f32
    %6 = vector.broadcast %cst_5 : f32 to vector<16x512xf32>
    %7 = arith.maximumf %5, %6 : vector<16x512xf32>
    %c0_6 = arith.constant 0 : index
    %c0_7 = arith.constant 0 : index
    %8 = vector.load %arg4[%c0_6, %c0_7] : memref<512x128xf32, #tpu.memory_space<vmem>>, vector<512x128xf32>
    %cst_8 = arith.constant dense<0.000000e+00> : vector<16x128xf32>
    %9 = tpu.matmul %7, %8, %cst_8 {dimension_numbers = #tpu.dot_dimension_numbers<[1], [0], [0], [1], [0, 0, 1, 1], [], []>} : vector<16x512xf32>, vector<512x128xf32>, vector<16x128xf32> -> vector<16x128xf32>
    %c0_9 = arith.constant 0 : index
    %c0_10 = arith.constant 0 : index
    %10 = vector.load %arg5[%c0_9, %c0_10] : memref<1x128xf32, #tpu.memory_space<vmem>>, vector<1x128xf32>
    %11 = vector.broadcast %10 : vector<1x128xf32> to vector<16x128xf32>
    %12 = arith.addf %9, %11 : vector<16x128xf32>
    %cst_11 = arith.constant 0.000000e+00 : f32
    %13 = vector.broadcast %cst_11 : f32 to vector<16x128xf32>
    %14 = arith.maximumf %12, %13 : vector<16x128xf32>
    %c0_12 = arith.constant 0 : index
    %c0_13 = arith.constant 0 : index
    %15 = vector.load %arg6[%c0_12, %c0_13] : memref<128x128xf32, #tpu.memory_space<vmem>>, vector<128x128xf32>
    %cst_14 = arith.constant dense<0.000000e+00> : vector<16x128xf32>
    %16 = tpu.matmul %14, %15, %cst_14 {dimension_numbers = #tpu.dot_dimension_numbers<[1], [0], [0], [1], [0, 0, 1, 1], [], []>} : vector<16x128xf32>, vector<128x128xf32>, vector<16x128xf32> -> vector<16x128xf32>
    %c0_15 = arith.constant 0 : index
    %c0_16 = arith.constant 0 : index
    %17 = vector.load %arg7[%c0_15, %c0_16] : memref<1x128xf32, #tpu.memory_space<vmem>>, vector<1x128xf32>
    %18 = vector.broadcast %17 : vector<1x128xf32> to vector<16x128xf32>
    %19 = arith.addf %16, %18 : vector<16x128xf32>
    %c0_17 = arith.constant 0 : index
    %c0_18 = arith.constant 0 : index
    %20 = vector.load %arg8[%c0_17, %c0_18] : memref<16x128xf32, #tpu.memory_space<vmem>>, vector<16x128xf32>
    tpu.vector_store %arg8[%c0_17, %c0_18], %19 {strides = array<i32>} : memref<16x128xf32, #tpu.memory_space<vmem>>, vector<16x128xf32>,
    return
  }
  func.func @transform_0(%arg0: i32) -> (i32, i32) {
    %c0_i32 = arith.constant 0 : i32
    %c0_i32_0 = arith.constant 0 : i32
    return %arg0, %c0_i32 : i32, i32
  }
  func.func @transform_1(%arg0: i32) -> (i32, i32) {
    %c0_i32 = arith.constant 0 : i32
    %c0_i32_0 = arith.constant 0 : i32
    %c0_i32_1 = arith.constant 0 : i32
    return %c0_i32, %c0_i32_0 : i32, i32
  }
  func.func @transform_2(%arg0: i32) -> (i32, i32) {
    %c0_i32 = arith.constant 0 : i32
    %c0_i32_0 = arith.constant 0 : i32
    %c0_i32_1 = arith.constant 0 : i32
    return %c0_i32, %c0_i32_0 : i32, i32
  }
  func.func @transform_3(%arg0: i32) -> (i32, i32) {
    %c0_i32 = arith.constant 0 : i32
    %c0_i32_0 = arith.constant 0 : i32
    %c0_i32_1 = arith.constant 0 : i32
    return %c0_i32, %c0_i32_0 : i32, i32
  }
  func.func @transform_4(%arg0: i32) -> (i32, i32) {
    %c0_i32 = arith.constant 0 : i32
    %c0_i32_0 = arith.constant 0 : i32
    %c0_i32_1 = arith.constant 0 : i32
    return %c0_i32, %c0_i32_0 : i32, i32
  }
  func.func @transform_5(%arg0: i32) -> (i32, i32) {
    %c0_i32 = arith.constant 0 : i32
    %c0_i32_0 = arith.constant 0 : i32
    %c0_i32_1 = arith.constant 0 : i32
    return %c0_i32, %c0_i32_0 : i32, i32
  }
  func.func @transform_6(%arg0: i32) -> (i32, i32) {
    %c0_i32 = arith.constant 0 : i32
    %c0_i32_0 = arith.constant 0 : i32
    %c0_i32_1 = arith.constant 0 : i32
    return %c0_i32, %c0_i32_0 : i32, i32
  }
  func.func @transform_7(%arg0: i32) -> (i32, i32) {
    %c0_i32 = arith.constant 0 : i32
    %c0_i32_0 = arith.constant 0 : i32
    return %arg0, %c0_i32 : i32, i32
  }
}

</mosaic_0001>

<llo_original>
// kernel: prober_cifar100_forward.1
$region0: #{prober_cifar100_forward.1}
  #allocation0 [shape = 'u32[]', space=smem, size = 0x4, offset = 0x4, fixed_abs, tag = 'smem constant byte address 0x4 - core index']
  #allocation1 [shape = 'u32[144,128]{1,0:T(1,128)}', space=vmem, size = 0x12000, scoped, tag = 'internal scratch']
  %s0 = inlined_call_operand.vmem [shape: f32[16,512], index: 0, kind: input, shape index: {}]
  %s1 = inlined_call_operand.hbm [shape: f32[512,512], index: 1, kind: input, shape index: {}]
  %s2 = inlined_call_operand.vmem [shape: f32[1,512], index: 2, kind: input, shape index: {}]
  %s3 = inlined_call_operand.vmem [shape: f32[512,128], index: 3, kind: input, shape index: {}]
  %s4 = inlined_call_operand.vmem [shape: f32[1,128], index: 4, kind: input, shape index: {}]
  %s5 = inlined_call_operand.vmem [shape: f32[128,128], index: 5, kind: input, shape index: {}]
  %s6 = inlined_call_operand.vmem [shape: f32[1,128], index: 6, kind: input, shape index: {}]
  %s7 = inlined_call_operand.vmem [shape: f32[16,128], index: 7, kind: output, shape index: {}]
  %s8 = sld [smem:[#allocation0]]
  $region42: #{prober_cifar100_forward.1} parent=0
    _
  %s10 = ssub.s32 1, %s8
  %s11 = scalar_select 0, %s10, %s8
  $region1: #{prober_cifar100_forward.1} parent=0
    #allocation2 [shape = 'u8[1048576]{0}', space=vmem, size = 0x100000, scoped, tag = 'input window, operand 1, single buffered']
    #allocation3 [shape = 's32[1]{0}', space=sflag, size = 0x4, scoped, tag = 'scoped memory for prober_cifar100_forward.1']
    %12 = vsyncpa [#allocation3], 0
    // Predicated region
    $region2: #{prober_cifar100_forward.1} parent=1 // pred_check
      _
    $region3: #{prober_cifar100_forward.1} parent=1 // pred_check_branch
      %14 = sbr.rel (0) target = $region5
    $region4: #{prober_cifar100_forward.1} parent=1 // pred_region
      _
    $region5: #{prober_cifar100_forward.1} parent=1 // pred_fallthru
      _
    // Predicated region
    $region6: #{prober_cifar100_forward.1} parent=1 // pred_check
      _
    $region7: #{prober_cifar100_forward.1} parent=1 // pred_check_branch
      %16 = sbr.rel (0) target = $region9
    $region8: #{prober_cifar100_forward.1} parent=1 // pred_region
      %s18 = ssub.s32 32768, 32768
      %19 = vsyncadd [#allocation3], %s18
      %s20 = sshll.u32 [#allocation2], 4
      %s21 = int_to_ptr.vmem [resolvable:$true] %s20
      %26 = dma.hbm_to_vmem [thread:$0]  %s1, 32768, %s21, [#allocation3], 512, 512, 32
    $region9: #{prober_cifar100_forward.1} parent=1 // pred_fallthru
      _
    // Predicated region
    $region10: #{prober_cifar100_forward.1} parent=1 // pred_check
      _
    $region11: #{prober_cifar100_forward.1} parent=1 // pred_check_branch
      %28 = sbr.rel (0) target = $region13
    $region12: #{prober_cifar100_forward.1} parent=1 // pred_region
      _
    $region13: #{prober_cifar100_forward.1} parent=1 // pred_fallthru
      _
    // Predicated region
    $region14: #{prober_cifar100_forward.1} parent=1 // pred_check
      _
    $region15: #{prober_cifar100_forward.1} parent=1 // pred_check_branch
      %30 = sbr.rel (0) target = $region17
    $region16: #{prober_cifar100_forward.1} parent=1 // pred_region
      _
    $region17: #{prober_cifar100_forward.1} parent=1 // pred_fallthru
      _
    // Predicated region
    $region18: #{prober_cifar100_forward.1} parent=1 // pred_check
      _
    $region19: #{prober_cifar100_forward.1} parent=1 // pred_check_branch
      %32 = sbr.rel (0) target = $region21
    $region20: #{prober_cifar100_forward.1} parent=1 // pred_region
      _
    $region21: #{prober_cifar100_forward.1} parent=1 // pred_fallthru
      _
    // Predicated region
    $region22: #{prober_cifar100_forward.1} parent=1 // pred_check
      _
    $region23: #{prober_cifar100_forward.1} parent=1 // pred_check_branch
      %34 = sbr.rel (0) target = $region25
    $region24: #{prober_cifar100_forward.1} parent=1 // pred_region
      _
    $region25: #{prober_cifar100_forward.1} parent=1 // pred_fallthru
      _
    // Predicated region
    $region26: #{prober_cifar100_forward.1} parent=1 // pred_check
      _
    $region27: #{prober_cifar100_forward.1} parent=1 // pred_check_branch
      %36 = sbr.rel (0) target = $region29
    $region28: #{prober_cifar100_forward.1} parent=1 // pred_region
      _
    $region29: #{prober_cifar100_forward.1} parent=1 // pred_fallthru
      _
    // Predicated region
    $region30: #{prober_cifar100_forward.1} parent=1 // pred_check
      _
    $region31: #{prober_cifar100_forward.1} parent=1 // pred_check_branch
      %38 = sbr.rel (0) target = $region33
    $region32: #{prober_cifar100_forward.1} parent=1 // pred_region
      %39 = dma.done [#allocation3], 32768
    $region33: #{prober_cifar100_forward.1} parent=1 // pred_fallthru
      _
    %v40 = vld [vmem:[%s0] sm:$0xff]
    %v41 = vld [vmem:[%s0 + $0x8] sm:$0xff]
    %v42 = vld [vmem:[%s0 + $0x10] sm:$0xff]
    %v43 = vld [vmem:[%s0 + $0x18] sm:$0xff]
    %v44 = vld [vmem:[%s0 + $0x20] sm:$0xff]
    %v45 = vld [vmem:[%s0 + $0x28] sm:$0xff]
    %v46 = vld [vmem:[%s0 + $0x30] sm:$0xff]
    %v47 = vld [vmem:[%s0 + $0x38] sm:$0xff]
    %v48 = vld [vmem:[#allocation2] sm:$0xff]
    %v49 = vld [vmem:[#allocation2 + $0x8] sm:$0xff]
    %v50 = vld [vmem:[#allocation2 + $0x10] sm:$0xff]
    %v51 = vld [vmem:[#allocation2 + $0x18] sm:$0xff]
    %v52 = vld [vmem:[#allocation2 + $0x20] sm:$0xff]
    %v53 = vld [vmem:[#allocation2 + $0x28] sm:$0xff]
    %v54 = vld [vmem:[#allocation2 + $0x30] sm:$0xff]
    %v55 = vld [vmem:[#allocation2 + $0x38] sm:$0xff]
    %v56 = vld [vmem:[#allocation2 + $0x40] sm:$0xff]
    %v57 = vld [vmem:[#allocation2 + $0x48] sm:$0xff]
    %v58 = vld [vmem:[#allocation2 + $0x50] sm:$0xff]
    %v59 = vld [vmem:[#allocation2 + $0x58] sm:$0xff]
    %v60 = vld [vmem:[#allocation2 + $0x60] sm:$0xff]
    %v61 = vld [vmem:[#allocation2 + $0x68] sm:$0xff]
    %v62 = vld [vmem:[#allocation2 + $0x70] sm:$0xff]
    %v63 = vld [vmem:[#allocation2 + $0x78] sm:$0xff]
    %v64 = vld [vmem:[#allocation2 + $0x80] sm:$0xff]
    %v65 = vld [vmem:[#allocation2 + $0x88] sm:$0xff]
    %v66 = vld [vmem:[#allocation2 + $0x90] sm:$0xff]
    %v67 = vld [vmem:[#allocation2 + $0x98] sm:$0xff]
    %v68 = vld [vmem:[#allocation2 + $0xa0] sm:$0xff]
    %v69 = vld [vmem:[#allocation2 + $0xa8] sm:$0xff]
    %v70 = vld [vmem:[#allocation2 + $0xb0] sm:$0xff]
    %v71 = vld [vmem:[#allocation2 + $0xb8] sm:$0xff]
    %v72 = vld [vmem:[#allocation2 + $0xc0] sm:$0xff]
    %v73 = vld [vmem:[#allocation2 + $0xc8] sm:$0xff]
    %v74 = vld [vmem:[#allocation2 + $0xd0] sm:$0xff]
    %v75 = vld [vmem:[#allocation2 + $0xd8] sm:$0xff]
    %v76 = vld [vmem:[#allocation2 + $0xe0] sm:$0xff]
    %v77 = vld [vmem:[#allocation2 + $0xe8] sm:$0xff]
    %v78 = vld [vmem:[#allocation2 + $0xf0] sm:$0xff]
    %v79 = vld [vmem:[#allocation2 + $0xf8] sm:$0xff]
    %v80 = vld [vmem:[#allocation2 + $0x100] sm:$0xff]
    %v81 = vld [vmem:[#allocation2 + $0x108] sm:$0xff]
    %v82 = vld [vmem:[#allocation2 + $0x110] sm:$0xff]
    %v83 = vld [vmem:[#allocation2 + $0x118] sm:$0xff]
    %v84 = vld [vmem:[#allocation2 + $0x120] sm:$0xff]
    %v85 = vld [vmem:[#allocation2 + $0x128] sm:$0xff]
    %v86 = vld [vmem:[#allocation2 + $0x130] sm:$0xff]
    %v87 = vld [vmem:[#allocation2 + $0x138] sm:$0xff]
    %v88 = vld [vmem:[#allocation2 + $0x140] sm:$0xff]
    %v89 = vld [vmem:[#allocation2 + $0x148] sm:$0xff]
    %v90 = vld [vmem:[#allocation2 + $0x150] sm:$0xff]
    %v91 = vld [vmem:[#allocation2 + $0x158] sm:$0xff]
    %v92 = vld [vmem:[#allocation2 + $0x160] sm:$0xff]
    %v93 = vld [vmem:[#allocation2 + $0x168] sm:$0xff]
    %v94 = vld [vmem:[#allocation2 + $0x170] sm:$0xff]
    %v95 = vld [vmem:[#allocation2 + $0x178] sm:$0xff]
    %v96 = vld [vmem:[#allocation2 + $0x180] sm:$0xff]
    %v97 = vld [vmem:[#allocation2 + $0x188] sm:$0xff]
    %v98 = vld [vmem:[#allocation2 + $0x190] sm:$0xff]
    %v99 = vld [vmem:[#allocation2 + $0x198] sm:$0xff]
    %v100 = vld [vmem:[#allocation2 + $0x1a0] sm:$0xff]
    %v101 = vld [vmem:[#allocation2 + $0x1a8] sm:$0xff]
    %v102 = vld [vmem:[#allocation2 + $0x1b0] sm:$0xff]
    %v103 = vld [vmem:[#allocation2 + $0x1b8] sm:$0xff]
    %v104 = vld [vmem:[#allocation2 + $0x1c0] sm:$0xff]
    %v105 = vld [vmem:[#allocation2 + $0x1c8] sm:$0xff]
    %v106 = vld [vmem:[#allocation2 + $0x1d0] sm:$0xff]
    %v107 = vld [vmem:[#allocation2 + $0x1d8] sm:$0xff]
    %v108 = vld [vmem:[#allocation2 + $0x1e0] sm:$0xff]
    %v109 = vld [vmem:[#allocation2 + $0x1e8] sm:$0xff]
    %v110 = vld [vmem:[#allocation2 + $0x1f0] sm:$0xff]
    %v111 = vld [vmem:[#allocation2 + $0x1f8] sm:$0xff]
    %v112 = vld [vmem:[#allocation2 + $0x200] sm:$0xff]
    %v113 = vld [vmem:[#allocation2 + $0x208] sm:$0xff]
    %v114 = vld [vmem:[#allocation2 + $0x210] sm:$0xff]
    %v115 = vld [vmem:[#allocation2 + $0x218] sm:$0xff]
    %v116 = vld [vmem:[#allocation2 + $0x220] sm:$0xff]
    %v117 = vld [vmem:[#allocation2 + $0x228] sm:$0xff]
    %v118 = vld [vmem:[#allocation2 + $0x230] sm:$0xff]
    %v119 = vld [vmem:[#allocation2 + $0x238] sm:$0xff]
    %v120 = vld [vmem:[#allocation2 + $0x240] sm:$0xff]
    %v121 = vld [vmem:[#allocation2 + $0x248] sm:$0xff]
    %v122 = vld [vmem:[#allocation2 + $0x250] sm:$0xff]
    %v123 = vld [vmem:[#allocation2 + $0x258] sm:$0xff]
    %v124 = vld [vmem:[#allocation2 + $0x260] sm:$0xff]
    %v125 = vld [vmem:[#allocation2 + $0x268] sm:$0xff]
    %v126 = vld [vmem:[#allocation2 + $0x270] sm:$0xff]
    %v127 = vld [vmem:[#allocation2 + $0x278] sm:$0xff]
    %v128 = vld [vmem:[#allocation2 + $0x280] sm:$0xff]
    %v129 = vld [vmem:[#allocation2 + $0x288] sm:$0xff]
    %v130 = vld [vmem:[#allocation2 + $0x290] sm:$0xff]
    %v131 = vld [vmem:[#allocation2 + $0x298] sm:$0xff]
    %v132 = vld [vmem:[#allocation2 + $0x2a0] sm:$0xff]
    %v133 = vld [vmem:[#allocation2 + $0x2a8] sm:$0xff]
    %v134 = vld [vmem:[#allocation2 + $0x2b0] sm:$0xff]
    %v135 = vld [vmem:[#allocation2 + $0x2b8] sm:$0xff]
    %v136 = vld [vmem:[#allocation2 + $0x2c0] sm:$0xff]
    %v137 = vld [vmem:[#allocation2 + $0x2c8] sm:$0xff]
    %v138 = vld [vmem:[#allocation2 + $0x2d0] sm:$0xff]
    %v139 = vld [vmem:[#allocation2 + $0x2d8] sm:$0xff]
    %v140 = vld [vmem:[#allocation2 + $0x2e0] sm:$0xff]
    %v141 = vld [vmem:[#allocation2 + $0x2e8] sm:$0xff]
    %v142 = vld [vmem:[#allocation2 + $0x2f0] sm:$0xff]
    %v143 = vld [vmem:[#allocation2 + $0x2f8] sm:$0xff]
    %v144 = vld [vmem:[#allocation2 + $0x300] sm:$0xff]
    %v145 = vld [vmem:[#allocation2 + $0x308] sm:$0xff]
    %v146 = vld [vmem:[#allocation2 + $0x310] sm:$0xff]
    %v147 = vld [vmem:[#allocation2 + $0x318] sm:$0xff]
    %v148 = vld [vmem:[#allocation2 + $0x320] sm:$0xff]
    %v149 = vld [vmem:[#allocation2 + $0x328] sm:$0xff]
    %v150 = vld [vmem:[#allocation2 + $0x330] sm:$0xff]
    %v151 = vld [vmem:[#allocation2 + $0x338] sm:$0xff]
    %v152 = vld [vmem:[#allocation2 + $0x340] sm:$0xff]
    %v153 = vld [vmem:[#allocation2 + $0x348] sm:$0xff]
    %v154 = vld [vmem:[#allocation2 + $0x350] sm:$0xff]
    %v155 = vld [vmem:[#allocation2 + $0x358] sm:$0xff]
    %v156 = vld [vmem:[#allocation2 + $0x360] sm:$0xff]
    %v157 = vld [vmem:[#allocation2 + $0x368] sm:$0xff]
    %v158 = vld [vmem:[#allocation2 + $0x370] sm:$0xff]
    %v159 = vld [vmem:[#allocation2 + $0x378] sm:$0xff]
    %v160 = vld [vmem:[#allocation2 + $0x380] sm:$0xff]
    %v161 = vld [vmem:[#allocation2 + $0x388] sm:$0xff]
    %v162 = vld [vmem:[#allocation2 + $0x390] sm:$0xff]
    %v163 = vld [vmem:[#allocation2 + $0x398] sm:$0xff]
    %v164 = vld [vmem:[#allocation2 + $0x3a0] sm:$0xff]
    %v165 = vld [vmem:[#allocation2 + $0x3a8] sm:$0xff]
    %v166 = vld [vmem:[#allocation2 + $0x3b0] sm:$0xff]
    %v167 = vld [vmem:[#allocation2 + $0x3b8] sm:$0xff]
    %v168 = vld [vmem:[#allocation2 + $0x3c0] sm:$0xff]
    %v169 = vld [vmem:[#allocation2 + $0x3c8] sm:$0xff]
    %v170 = vld [vmem:[#allocation2 + $0x3d0] sm:$0xff]
    %v171 = vld [vmem:[#allocation2 + $0x3d8] sm:$0xff]
    %v172 = vld [vmem:[#allocation2 + $0x3e0] sm:$0xff]
    %v173 = vld [vmem:[#allocation2 + $0x3e8] sm:$0xff]
    %v174 = vld [vmem:[#allocation2 + $0x3f0] sm:$0xff]
    %v175 = vld [vmem:[#allocation2 + $0x3f8] sm:$0xff]
    %v176 = vld [vmem:[#allocation2 + $0x400] sm:$0xff]
    %v177 = vld [vmem:[#allocation2 + $0x408] sm:$0xff]
    %v178 = vld [vmem:[#allocation2 + $0x410] sm:$0xff]
    %v179 = vld [vmem:[#allocation2 + $0x418] sm:$0xff]
    %v180 = vld [vmem:[#allocation2 + $0x420] sm:$0xff]
    %v181 = vld [vmem:[#allocation2 + $0x428] sm:$0xff]
    %v182 = vld [vmem:[#allocation2 + $0x430] sm:$0xff]
    %v183 = vld [vmem:[#allocation2 + $0x438] sm:$0xff]
    %v184 = vld [vmem:[#allocation2 + $0x440] sm:$0xff]
    %v185 = vld [vmem:[#allocation2 + $0x448] sm:$0xff]
    %v186 = vld [vmem:[#allocation2 + $0x450] sm:$0xff]
    %v187 = vld [vmem:[#allocation2 + $0x458] sm:$0xff]
    %v188 = vld [vmem:[#allocation2 + $0x460] sm:$0xff]
    %v189 = vld [vmem:[#allocation2 + $0x468] sm:$0xff]
    %v190 = vld [vmem:[#allocation2 + $0x470] sm:$0xff]
    %v191 = vld [vmem:[#allocation2 + $0x478] sm:$0xff]
    %v192 = vld [vmem:[#allocation2 + $0x480] sm:$0xff]
    %v193 = vld [vmem:[#allocation2 + $0x488] sm:$0xff]
    %v194 = vld [vmem:[#allocation2 + $0x490] sm:$0xff]
    %v195 = vld [vmem:[#allocation2 + $0x498] sm:$0xff]
    %v196 = vld [vmem:[#allocation2 + $0x4a0] sm:$0xff]
    %v197 = vld [vmem:[#allocation2 + $0x4a8] sm:$0xff]
    %v198 = vld [vmem:[#allocation2 + $0x4b0] sm:$0xff]
    %v199 = vld [vmem:[#allocation2 + $0x4b8] sm:$0xff]
    %v200 = vld [vmem:[#allocation2 + $0x4c0] sm:$0xff]
    %v201 = vld [vmem:[#allocation2 + $0x4c8] sm:$0xff]
    %v202 = vld [vmem:[#allocation2 + $0x4d0] sm:$0xff]
    %v203 = vld [vmem:[#allocation2 + $0x4d8] sm:$0xff]
    %v204 = vld [vmem:[#allocation2 + $0x4e0] sm:$0xff]
    %v205 = vld [vmem:[#allocation2 + $0x4e8] sm:$0xff]
    %v206 = vld [vmem:[#allocation2 + $0x4f0] sm:$0xff]
    %v207 = vld [vmem:[#allocation2 + $0x4f8] sm:$0xff]
    %v208 = vld [vmem:[#allocation2 + $0x500] sm:$0xff]
    %v209 = vld [vmem:[#allocation2 + $0x508] sm:$0xff]
    %v210 = vld [vmem:[#allocation2 + $0x510] sm:$0xff]
    %v211 = vld [vmem:[#allocation2 + $0x518] sm:$0xff]
    %v212 = vld [vmem:[#allocation2 + $0x520] sm:$0xff]
    %v213 = vld [vmem:[#allocation2 + $0x528] sm:$0xff]
    %v214 = vld [vmem:[#allocation2 + $0x530] sm:$0xff]
    %v215 = vld [vmem:[#allocation2 + $0x538] sm:$0xff]
    %v216 = vld [vmem:[#allocation2 + $0x540] sm:$0xff]
    %v217 = vld [vmem:[#allocation2 + $0x548] sm:$0xff]
    %v218 = vld [vmem:[#allocation2 + $0x550] sm:$0xff]
    %v219 = vld [vmem:[#allocation2 + $0x558] sm:$0xff]
    %v220 = vld [vmem:[#allocation2 + $0x560] sm:$0xff]
    %v221 = vld [vmem:[#allocation2 + $0x568] sm:$0xff]
    %v222 = vld [vmem:[#allocation2 + $0x570] sm:$0xff]
    %v223 = vld [vmem:[#allocation2 + $0x578] sm:$0xff]
    %v224 = vld [vmem:[#allocation2 + $0x580] sm:$0xff]
    %v225 = vld [vmem:[#allocation2 + $0x588] sm:$0xff]
    %v226 = vld [vmem:[#allocation2 + $0x590] sm:$0xff]
    %v227 = vld [vmem:[#allocation2 + $0x598] sm:$0xff]
    %v228 = vld [vmem:[#allocation2 + $0x5a0] sm:$0xff]
    %v229 = vld [vmem:[#allocation2 + $0x5a8] sm:$0xff]
    %v230 = vld [vmem:[#allocation2 + $0x5b0] sm:$0xff]
    %v231 = vld [vmem:[#allocation2 + $0x5b8] sm:$0xff]
    %v232 = vld [vmem:[#allocation2 + $0x5c0] sm:$0xff]
    %v233 = vld [vmem:[#allocation2 + $0x5c8] sm:$0xff]
    %v234 = vld [vmem:[#allocation2 + $0x5d0] sm:$0xff]
    %v235 = vld [vmem:[#allocation2 + $0x5d8] sm:$0xff]
    %v236 = vld [vmem:[#allocation2 + $0x5e0] sm:$0xff]
    %v237 = vld [vmem:[#allocation2 + $0x5e8] sm:$0xff]
    %v238 = vld [vmem:[#allocation2 + $0x5f0] sm:$0xff]
    %v239 = vld [vmem:[#allocation2 + $0x5f8] sm:$0xff]
    %v240 = vld [vmem:[#allocation2 + $0x600] sm:$0xff]
    %v241 = vld [vmem:[#allocation2 + $0x608] sm:$0xff]
    %v242 = vld [vmem:[#allocation2 + $0x610] sm:$0xff]
    %v243 = vld [vmem:[#allocation2 + $0x618] sm:$0xff]
    %v244 = vld [vmem:[#allocation2 + $0x620] sm:$0xff]
    %v245 = vld [vmem:[#allocation2 + $0x628] sm:$0xff]
    %v246 = vld [vmem:[#allocation2 + $0x630] sm:$0xff]
    %v247 = vld [vmem:[#allocation2 + $0x638] sm:$0xff]
    %v248 = vld [vmem:[#allocation2 + $0x640] sm:$0xff]
    %v249 = vld [vmem:[#allocation2 + $0x648] sm:$0xff]
    %v250 = vld [vmem:[#allocation2 + $0x650] sm:$0xff]
    %v251 = vld [vmem:[#allocation2 + $0x658] sm:$0xff]
    %v252 = vld [vmem:[#allocation2 + $0x660] sm:$0xff]
    %v253 = vld [vmem:[#allocation2 + $0x668] sm:$0xff]
    %v254 = vld [vmem:[#allocation2 + $0x670] sm:$0xff]
    %v255 = vld [vmem:[#allocation2 + $0x678] sm:$0xff]
    %v256 = vld [vmem:[#allocation2 + $0x680] sm:$0xff]
    %v257 = vld [vmem:[#allocation2 + $0x688] sm:$0xff]
    %v258 = vld [vmem:[#allocation2 + $0x690] sm:$0xff]
    %v259 = vld [vmem:[#allocation2 + $0x698] sm:$0xff]
    %v260 = vld [vmem:[#allocation2 + $0x6a0] sm:$0xff]
    %v261 = vld [vmem:[#allocation2 + $0x6a8] sm:$0xff]
    %v262 = vld [vmem:[#allocation2 + $0x6b0] sm:$0xff]
    %v263 = vld [vmem:[#allocation2 + $0x6b8] sm:$0xff]
    %v264 = vld [vmem:[#allocation2 + $0x6c0] sm:$0xff]
    %v265 = vld [vmem:[#allocation2 + $0x6c8] sm:$0xff]
    %v266 = vld [vmem:[#allocation2 + $0x6d0] sm:$0xff]
    %v267 = vld [vmem:[#allocation2 + $0x6d8] sm:$0xff]
    %v268 = vld [vmem:[#allocation2 + $0x6e0] sm:$0xff]
    %v269 = vld [vmem:[#allocation2 + $0x6e8] sm:$0xff]
    %v270 = vld [vmem:[#allocation2 + $0x6f0] sm:$0xff]
    %v271 = vld [vmem:[#allocation2 + $0x6f8] sm:$0xff]
    %v272 = vld [vmem:[#allocation2 + $0x700] sm:$0xff]
    %v273 = vld [vmem:[#allocation2 + $0x708] sm:$0xff]
    %v274 = vld [vmem:[#allocation2 + $0x710] sm:$0xff]
    %v275 = vld [vmem:[#allocation2 + $0x718] sm:$0xff]
    %v276 = vld [vmem:[#allocation2 + $0x720] sm:$0xff]
    %v277 = vld [vmem:[#allocation2 + $0x728] sm:$0xff]
    %v278 = vld [vmem:[#allocation2 + $0x730] sm:$0xff]
    %v279 = vld [vmem:[#allocation2 + $0x738] sm:$0xff]
    %v280 = vld [vmem:[#allocation2 + $0x740] sm:$0xff]
    %v281 = vld [vmem:[#allocation2 + $0x748] sm:$0xff]
    %v282 = vld [vmem:[#allocation2 + $0x750] sm:$0xff]
    %v283 = vld [vmem:[#allocation2 + $0x758] sm:$0xff]
    %v284 = vld [vmem:[#allocation2 + $0x760] sm:$0xff]
    %v285 = vld [vmem:[#allocation2 + $0x768] sm:$0xff]
    %v286 = vld [vmem:[#allocation2 + $0x770] sm:$0xff]
    %v287 = vld [vmem:[#allocation2 + $0x778] sm:$0xff]
    %v288 = vld [vmem:[#allocation2 + $0x780] sm:$0xff]
    %v289 = vld [vmem:[#allocation2 + $0x788] sm:$0xff]
    %v290 = vld [vmem:[#allocation2 + $0x790] sm:$0xff]
    %v291 = vld [vmem:[#allocation2 + $0x798] sm:$0xff]
    %v292 = vld [vmem:[#allocation2 + $0x7a0] sm:$0xff]
    %v293 = vld [vmem:[#allocation2 + $0x7a8] sm:$0xff]
    %v294 = vld [vmem:[#allocation2 + $0x7b0] sm:$0xff]
    %v295 = vld [vmem:[#allocation2 + $0x7b8] sm:$0xff]
    %v296 = vld [vmem:[#allocation2 + $0x7c0] sm:$0xff]
    %v297 = vld [vmem:[#allocation2 + $0x7c8] sm:$0xff]
    %v298 = vld [vmem:[#allocation2 + $0x7d0] sm:$0xff]
    %v299 = vld [vmem:[#allocation2 + $0x7d8] sm:$0xff]
    %v300 = vld [vmem:[#allocation2 + $0x7e0] sm:$0xff]
    %v301 = vld [vmem:[#allocation2 + $0x7e8] sm:$0xff]
    %v302 = vld [vmem:[#allocation2 + $0x7f0] sm:$0xff]
    %v303 = vld [vmem:[#allocation2 + $0x7f8] sm:$0xff]
    %v304 = vld [vmem:[%s2] sm:$0xf]
    %v306 = vlaneseq
    %v307 = vshrl.u32 %v306, 7
    %v308 = vsub.s32 0, %v307
    %v309 = vrot.slane %v304, %v308
    %v310 = vlaneseq
    %v311 = vshrl.u32 %v310, 7
    %v312 = vsub.s32 1, %v311
    %v313 = vrot.slane %v304, %v312
    %v314 = vlaneseq
    %v315 = vshrl.u32 %v314, 7
    %v316 = vsub.s32 2, %v315
    %v317 = vrot.slane %v304, %v316
    %v318 = vlaneseq
    %v319 = vshrl.u32 %v318, 7
    %v320 = vsub.s32 3, %v319
    %v321 = vrot.slane %v304, %v320
    %326 = vmatprep.subr.mxu0 %v109
    %327 = vmatpush1.msra.mxu0 %v108
    %328 = vmatprep.subr.mxu0 %v105
    %329 = vmatpush1.msra.mxu0 %v104
    %330 = vmatprep.subr.mxu0 %v101
    %331 = vmatpush1.msra.mxu0 %v100
    %332 = vmatprep.subr.mxu0 %v97
    %333 = vmatpush1.msra.mxu0 %v96
    %334 = vmatprep.subr.mxu0 %v93
    %335 = vmatpush1.msra.mxu0 %v92
    %336 = vmatprep.subr.mxu0 %v89
    %337 = vmatpush1.msra.mxu0 %v88
    %338 = vmatprep.subr.mxu0 %v85
    %339 = vmatpush1.msra.mxu0 %v84
    %340 = vmatprep.subr.mxu0 %v81
    %341 = vmatpush1.msra.mxu0 %v80
    %342 = vmatprep.subr.mxu0 %v77
    %343 = vmatpush1.msra.mxu0 %v76
    %344 = vmatprep.subr.mxu0 %v73
    %345 = vmatpush1.msra.mxu0 %v72
    %346 = vmatprep.subr.mxu0 %v69
    %347 = vmatpush1.msra.mxu0 %v68
    %348 = vmatprep.subr.mxu0 %v65
    %349 = vmatpush1.msra.mxu0 %v64
    %350 = vmatprep.subr.mxu0 %v61
    %351 = vmatpush1.msra.mxu0 %v60
    %352 = vmatprep.subr.mxu0 %v57
    %353 = vmatpush1.msra.mxu0 %v56
    %354 = vmatprep.subr.mxu0 %v53
    %355 = vmatpush1.msra.mxu0 %v52
    %356 = vmatprep.subr.mxu0 %v49
    %357 = vmatpush1.msra.mxu0 %v48
    %358 = vmatprep.subr.mxu0 %v173
    %359 = vmatpush2.msra.mxu0 %v172
    %360 = vmatprep.subr.mxu0 %v169
    %361 = vmatpush2.msra.mxu0 %v168
    %362 = vmatprep.subr.mxu0 %v165
    %363 = vmatpush2.msra.mxu0 %v164
    %364 = vmatprep.subr.mxu0 %v161
    %365 = vmatpush2.msra.mxu0 %v160
    %366 = vmatprep.subr.mxu0 %v157
    %367 = vmatpush2.msra.mxu0 %v156
    %368 = vmatprep.subr.mxu0 %v153
    %369 = vmatpush2.msra.mxu0 %v152
    %370 = vmatprep.subr.mxu0 %v149
    %371 = vmatpush2.msra.mxu0 %v148
    %372 = vmatprep.subr.mxu0 %v145
    %373 = vmatpush2.msra.mxu0 %v144
    %374 = vmatprep.subr.mxu0 %v141
    %375 = vmatpush2.msra.mxu0 %v140
    %376 = vmatprep.subr.mxu0 %v137
    %377 = vmatpush2.msra.mxu0 %v136
    %378 = vmatprep.subr.mxu0 %v133
    %379 = vmatpush2.msra.mxu0 %v132
    %380 = vmatprep.subr.mxu0 %v129
    %381 = vmatpush2.msra.mxu0 %v128
    %382 = vmatprep.subr.mxu0 %v125
    %383 = vmatpush2.msra.mxu0 %v124
    %384 = vmatprep.subr.mxu0 %v121
    %385 = vmatpush2.msra.mxu0 %v120
    %386 = vmatprep.subr.mxu0 %v117
    %387 = vmatpush2.msra.mxu0 %v116
    %388 = vmatprep.subr.mxu0 %v113
    %389 = vmatpush2.msra.mxu0 %v112
    %390 = vmatprep.mubr.f32.mxu0 %v41
    %391 = vmatmul.mubr.f32.gmra.mxu0 %v40
    %v392 = vpop.f32.mrf.mxu0
    %v393 = vadd.f32 %v309, %v392
    %v394 = vpop.f32.mrf.mxu0
    %v395 = vadd.f32 %v313, %v394
    %396 = vmatprep.mubr.f32.mxu0 %v45
    %397 = vmatmul.mubr.f32.gmra.mxu0 %v44
    %v398 = vpop.f32.mrf.mxu0
    %v399 = vadd.f32 %v309, %v398
    %v400 = vpop.f32.mrf.mxu0
    %v401 = vadd.f32 %v313, %v400
    %402 = vdwg.mxu0
    %403 = vmatprep.subr.mxu0 %v237
    %404 = vmatpush1.msra.mxu0 %v236
    %405 = vmatprep.subr.mxu0 %v233
    %406 = vmatpush1.msra.mxu0 %v232
    %407 = vmatprep.subr.mxu0 %v229
    %408 = vmatpush1.msra.mxu0 %v228
    %409 = vmatprep.subr.mxu0 %v225
    %410 = vmatpush1.msra.mxu0 %v224
    %411 = vmatprep.subr.mxu0 %v221
    %412 = vmatpush1.msra.mxu0 %v220
    %413 = vmatprep.subr.mxu0 %v217
    %414 = vmatpush1.msra.mxu0 %v216
    %415 = vmatprep.subr.mxu0 %v213
    %416 = vmatpush1.msra.mxu0 %v212
    %417 = vmatprep.subr.mxu0 %v209
    %418 = vmatpush1.msra.mxu0 %v208
    %419 = vmatprep.subr.mxu0 %v205
    %420 = vmatpush1.msra.mxu0 %v204
    %421 = vmatprep.subr.mxu0 %v201
    %422 = vmatpush1.msra.mxu0 %v200
    %423 = vmatprep.subr.mxu0 %v197
    %424 = vmatpush1.msra.mxu0 %v196
    %425 = vmatprep.subr.mxu0 %v193
    %426 = vmatpush1.msra.mxu0 %v192
    %427 = vmatprep.subr.mxu0 %v189
    %428 = vmatpush1.msra.mxu0 %v188
    %429 = vmatprep.subr.mxu0 %v185
    %430 = vmatpush1.msra.mxu0 %v184
    %431 = vmatprep.subr.mxu0 %v181
    %432 = vmatpush1.msra.mxu0 %v180
    %433 = vmatprep.subr.mxu0 %v177
    %434 = vmatpush1.msra.mxu0 %v176
    %435 = vmatprep.subr.mxu0 %v301
    %436 = vmatpush2.msra.mxu0 %v300
    %437 = vmatprep.subr.mxu0 %v297
    %438 = vmatpush2.msra.mxu0 %v296
    %439 = vmatprep.subr.mxu0 %v293
    %440 = vmatpush2.msra.mxu0 %v292
    %441 = vmatprep.subr.mxu0 %v289
    %442 = vmatpush2.msra.mxu0 %v288
    %443 = vmatprep.subr.mxu0 %v285
    %444 = vmatpush2.msra.mxu0 %v284
    %445 = vmatprep.subr.mxu0 %v281
    %446 = vmatpush2.msra.mxu0 %v280
    %447 = vmatprep.subr.mxu0 %v277
    %448 = vmatpush2.msra.mxu0 %v276
    %449 = vmatprep.subr.mxu0 %v273
    %450 = vmatpush2.msra.mxu0 %v272
    %451 = vmatprep.subr.mxu0 %v269
    %452 = vmatpush2.msra.mxu0 %v268
    %453 = vmatprep.subr.mxu0 %v265
    %454 = vmatpush2.msra.mxu0 %v264
    %455 = vmatprep.subr.mxu0 %v261
    %456 = vmatpush2.msra.mxu0 %v260
    %457 = vmatprep.subr.mxu0 %v257
    %458 = vmatpush2.msra.mxu0 %v256
    %459 = vmatprep.subr.mxu0 %v253
    %460 = vmatpush2.msra.mxu0 %v252
    %461 = vmatprep.subr.mxu0 %v249
    %462 = vmatpush2.msra.mxu0 %v248
    %463 = vmatprep.subr.mxu0 %v245
    %464 = vmatpush2.msra.mxu0 %v244
    %465 = vmatprep.subr.mxu0 %v241
    %466 = vmatpush2.msra.mxu0 %v240
    %467 = vmatprep.mubr.f32.mxu0 %v43
    %468 = vmatmul.mubr.f32.gmra.mxu0 %v42
    %v469 = vpop.f32.mrf.mxu0
    %v470 = vadd.f32 %v393, %v469
    %v471 = vpop.f32.mrf.mxu0
    %v472 = vadd.f32 %v395, %v471
    %473 = vmatprep.mubr.f32.mxu0 %v47
    %474 = vmatmul.mubr.f32.gmra.mxu0 %v46
    %v475 = vpop.f32.mrf.mxu0
    %v476 = vadd.f32 %v399, %v475
    %v477 = vpop.f32.mrf.mxu0
    %v478 = vadd.f32 %v401, %v477
    %479 = vdwg.mxu0
    %480 = vmatprep.subr.mxu0 %v111
    %481 = vmatpush1.msra.mxu0 %v110
    %482 = vmatprep.subr.mxu0 %v107
    %483 = vmatpush1.msra.mxu0 %v106
    %484 = vmatprep.subr.mxu0 %v103
    %485 = vmatpush1.msra.mxu0 %v102
    %486 = vmatprep.subr.mxu0 %v99
    %487 = vmatpush1.msra.mxu0 %v98
    %488 = vmatprep.subr.mxu0 %v95
    %489 = vmatpush1.msra.mxu0 %v94
    %490 = vmatprep.subr.mxu0 %v91
    %491 = vmatpush1.msra.mxu0 %v90
    %492 = vmatprep.subr.mxu0 %v87
    %493 = vmatpush1.msra.mxu0 %v86
    %494 = vmatprep.subr.mxu0 %v83
    %495 = vmatpush1.msra.mxu0 %v82
    %496 = vmatprep.subr.mxu0 %v79
    %497 = vmatpush1.msra.mxu0 %v78
    %498 = vmatprep.subr.mxu0 %v75
    %499 = vmatpush1.msra.mxu0 %v74
    %500 = vmatprep.subr.mxu0 %v71
    %501 = vmatpush1.msra.mxu0 %v70
    %502 = vmatprep.subr.mxu0 %v67
    %503 = vmatpush1.msra.mxu0 %v66
    %504 = vmatprep.subr.mxu0 %v63
    %505 = vmatpush1.msra.mxu0 %v62
    %506 = vmatprep.subr.mxu0 %v59
    %507 = vmatpush1.msra.mxu0 %v58
    %508 = vmatprep.subr.mxu0 %v55
    %509 = vmatpush1.msra.mxu0 %v54
    %510 = vmatprep.subr.mxu0 %v51
    %511 = vmatpush1.msra.mxu0 %v50
    %512 = vmatprep.subr.mxu0 %v175
    %513 = vmatpush2.msra.mxu0 %v174
    %514 = vmatprep.subr.mxu0 %v171
    %515 = vmatpush2.msra.mxu0 %v170
    %516 = vmatprep.subr.mxu0 %v167
    %517 = vmatpush2.msra.mxu0 %v166
    %518 = vmatprep.subr.mxu0 %v163
    %519 = vmatpush2.msra.mxu0 %v162
    %520 = vmatprep.subr.mxu0 %v159
    %521 = vmatpush2.msra.mxu0 %v158
    %522 = vmatprep.subr.mxu0 %v155
    %523 = vmatpush2.msra.mxu0 %v154
    %524 = vmatprep.subr.mxu0 %v151
    %525 = vmatpush2.msra.mxu0 %v150
    %526 = vmatprep.subr.mxu0 %v147
    %527 = vmatpush2.msra.mxu0 %v146
    %528 = vmatprep.subr.mxu0 %v143
    %529 = vmatpush2.msra.mxu0 %v142
    %530 = vmatprep.subr.mxu0 %v139
    %531 = vmatpush2.msra.mxu0 %v138
    %532 = vmatprep.subr.mxu0 %v135
    %533 = vmatpush2.msra.mxu0 %v134
    %534 = vmatprep.subr.mxu0 %v131
    %535 = vmatpush2.msra.mxu0 %v130
    %536 = vmatprep.subr.mxu0 %v127
    %537 = vmatpush2.msra.mxu0 %v126
    %538 = vmatprep.subr.mxu0 %v123
    %539 = vmatpush2.msra.mxu0 %v122
    %540 = vmatprep.subr.mxu0 %v119
    %541 = vmatpush2.msra.mxu0 %v118
    %542 = vmatprep.subr.mxu0 %v115
    %543 = vmatpush2.msra.mxu0 %v114
    %544 = vmatprep.mubr.f32.mxu0 %v41
    %545 = vmatmul.mubr.f32.gmra.mxu0 %v40
    %v546 = vpop.f32.mrf.mxu0
    %v547 = vadd.f32 %v317, %v546
    %v548 = vpop.f32.mrf.mxu0
    %v549 = vadd.f32 %v321, %v548
    %550 = vmatprep.mubr.f32.mxu0 %v45
    %551 = vmatmul.mubr.f32.gmra.mxu0 %v44
    %v552 = vpop.f32.mrf.mxu0
    %v553 = vadd.f32 %v317, %v552
    %v554 = vpop.f32.mrf.mxu0
    %v555 = vadd.f32 %v321, %v554
    %556 = vdwg.mxu0
    %557 = vmatprep.subr.mxu0 %v239
    %558 = vmatpush1.msra.mxu0 %v238
    %559 = vmatprep.subr.mxu0 %v235
    %560 = vmatpush1.msra.mxu0 %v234
    %561 = vmatprep.subr.mxu0 %v231
    %562 = vmatpush1.msra.mxu0 %v230
    %563 = vmatprep.subr.mxu0 %v227
    %564 = vmatpush1.msra.mxu0 %v226
    %565 = vmatprep.subr.mxu0 %v223
    %566 = vmatpush1.msra.mxu0 %v222
    %567 = vmatprep.subr.mxu0 %v219
    %568 = vmatpush1.msra.mxu0 %v218
    %569 = vmatprep.subr.mxu0 %v215
    %570 = vmatpush1.msra.mxu0 %v214
    %571 = vmatprep.subr.mxu0 %v211
    %572 = vmatpush1.msra.mxu0 %v210
    %573 = vmatprep.subr.mxu0 %v207
    %574 = vmatpush1.msra.mxu0 %v206
    %575 = vmatprep.subr.mxu0 %v203
    %576 = vmatpush1.msra.mxu0 %v202
    %577 = vmatprep.subr.mxu0 %v199
    %578 = vmatpush1.msra.mxu0 %v198
    %579 = vmatprep.subr.mxu0 %v195
    %580 = vmatpush1.msra.mxu0 %v194
    %581 = vmatprep.subr.mxu0 %v191
    %582 = vmatpush1.msra.mxu0 %v190
    %583 = vmatprep.subr.mxu0 %v187
    %584 = vmatpush1.msra.mxu0 %v186
    %585 = vmatprep.subr.mxu0 %v183
    %586 = vmatpush1.msra.mxu0 %v182
    %587 = vmatprep.subr.mxu0 %v179
    %588 = vmatpush1.msra.mxu0 %v178
    %589 = vmatprep.subr.mxu0 %v303
    %590 = vmatpush2.msra.mxu0 %v302
    %591 = vmatprep.subr.mxu0 %v299
    %592 = vmatpush2.msra.mxu0 %v298
    %593 = vmatprep.subr.mxu0 %v295
    %594 = vmatpush2.msra.mxu0 %v294
    %595 = vmatprep.subr.mxu0 %v291
    %596 = vmatpush2.msra.mxu0 %v290
    %597 = vmatprep.subr.mxu0 %v287
    %598 = vmatpush2.msra.mxu0 %v286
    %599 = vmatprep.subr.mxu0 %v283
    %600 = vmatpush2.msra.mxu0 %v282
    %601 = vmatprep.subr.mxu0 %v279
    %602 = vmatpush2.msra.mxu0 %v278
    %603 = vmatprep.subr.mxu0 %v275
    %604 = vmatpush2.msra.mxu0 %v274
    %605 = vmatprep.subr.mxu0 %v271
    %606 = vmatpush2.msra.mxu0 %v270
    %607 = vmatprep.subr.mxu0 %v267
    %608 = vmatpush2.msra.mxu0 %v266
    %609 = vmatprep.subr.mxu0 %v263
    %610 = vmatpush2.msra.mxu0 %v262
    %611 = vmatprep.subr.mxu0 %v259
    %612 = vmatpush2.msra.mxu0 %v258
    %613 = vmatprep.subr.mxu0 %v255
    %614 = vmatpush2.msra.mxu0 %v254
    %615 = vmatprep.subr.mxu0 %v251
    %616 = vmatpush2.msra.mxu0 %v250
    %617 = vmatprep.subr.mxu0 %v247
    %618 = vmatpush2.msra.mxu0 %v246
    %619 = vmatprep.subr.mxu0 %v243
    %620 = vmatpush2.msra.mxu0 %v242
    %621 = vmatprep.mubr.f32.mxu0 %v43
    %622 = vmatmul.mubr.f32.gmra.mxu0 %v42
    %v623 = vpop.f32.mrf.mxu0
    %v624 = vadd.f32 %v547, %v623
    %v625 = vpop.f32.mrf.mxu0
    %v626 = vadd.f32 %v549, %v625
    %627 = vmatprep.mubr.f32.mxu0 %v47
    %628 = vmatmul.mubr.f32.gmra.mxu0 %v46
    %v629 = vpop.f32.mrf.mxu0
    %v630 = vadd.f32 %v553, %v629
    %v631 = vpop.f32.mrf.mxu0
    %v632 = vadd.f32 %v555, %v631
    %633 = vdwg.mxu0
    %v634 = vmax.f32 %v470, 0.0
    %v635 = vmax.f32 %v472, 0.0
    %v636 = vmax.f32 %v624, 0.0
    %v637 = vmax.f32 %v626, 0.0
    %v638 = vmax.f32 %v476, 0.0
    %v639 = vmax.f32 %v478, 0.0
    %v640 = vmax.f32 %v630, 0.0
    %v641 = vmax.f32 %v632, 0.0
    %v642 = vld [vmem:[%s3] sm:$0xff]
    %v643 = vld [vmem:[%s3 + $0x8] sm:$0xff]
    %v644 = vld [vmem:[%s3 + $0x10] sm:$0xff]
    %v645 = vld [vmem:[%s3 + $0x18] sm:$0xff]
    %v646 = vld [vmem:[%s3 + $0x20] sm:$0xff]
    %v647 = vld [vmem:[%s3 + $0x28] sm:$0xff]
    %v648 = vld [vmem:[%s3 + $0x30] sm:$0xff]
    %v649 = vld [vmem:[%s3 + $0x38] sm:$0xff]
    %v650 = vld [vmem:[%s3 + $0x40] sm:$0xff]
    %v651 = vld [vmem:[%s3 + $0x48] sm:$0xff]
    %v652 = vld [vmem:[%s3 + $0x50] sm:$0xff]
    %v653 = vld [vmem:[%s3 + $0x58] sm:$0xff]
    %v654 = vld [vmem:[%s3 + $0x60] sm:$0xff]
    %v655 = vld [vmem:[%s3 + $0x68] sm:$0xff]
    %v656 = vld [vmem:[%s3 + $0x70] sm:$0xff]
    %v657 = vld [vmem:[%s3 + $0x78] sm:$0xff]
    %v658 = vld [vmem:[%s3 + $0x80] sm:$0xff]
    %v659 = vld [vmem:[%s3 + $0x88] sm:$0xff]
    %v660 = vld [vmem:[%s3 + $0x90] sm:$0xff]
    %v661 = vld [vmem:[%s3 + $0x98] sm:$0xff]
    %v662 = vld [vmem:[%s3 + $0xa0] sm:$0xff]
    %v663 = vld [vmem:[%s3 + $0xa8] sm:$0xff]
    %v664 = vld [vmem:[%s3 + $0xb0] sm:$0xff]
    %v665 = vld [vmem:[%s3 + $0xb8] sm:$0xff]
    %v666 = vld [vmem:[%s3 + $0xc0] sm:$0xff]
    %v667 = vld [vmem:[%s3 + $0xc8] sm:$0xff]
    %v668 = vld [vmem:[%s3 + $0xd0] sm:$0xff]
    %v669 = vld [vmem:[%s3 + $0xd8] sm:$0xff]
    %v670 = vld [vmem:[%s3 + $0xe0] sm:$0xff]
    %v671 = vld [vmem:[%s3 + $0xe8] sm:$0xff]
    %v672 = vld [vmem:[%s3 + $0xf0] sm:$0xff]
    %v673 = vld [vmem:[%s3 + $0xf8] sm:$0xff]
    %v674 = vld [vmem:[%s3 + $0x100] sm:$0xff]
    %v675 = vld [vmem:[%s3 + $0x108] sm:$0xff]
    %v676 = vld [vmem:[%s3 + $0x110] sm:$0xff]
    %v677 = vld [vmem:[%s3 + $0x118] sm:$0xff]
    %v678 = vld [vmem:[%s3 + $0x120] sm:$0xff]
    %v679 = vld [vmem:[%s3 + $0x128] sm:$0xff]
    %v680 = vld [vmem:[%s3 + $0x130] sm:$0xff]
    %v681 = vld [vmem:[%s3 + $0x138] sm:$0xff]
    %v682 = vld [vmem:[%s3 + $0x140] sm:$0xff]
    %v683 = vld [vmem:[%s3 + $0x148] sm:$0xff]
    %v684 = vld [vmem:[%s3 + $0x150] sm:$0xff]
    %v685 = vld [vmem:[%s3 + $0x158] sm:$0xff]
    %v686 = vld [vmem:[%s3 + $0x160] sm:$0xff]
    %v687 = vld [vmem:[%s3 + $0x168] sm:$0xff]
    %v688 = vld [vmem:[%s3 + $0x170] sm:$0xff]
    %v689 = vld [vmem:[%s3 + $0x178] sm:$0xff]
    %v690 = vld [vmem:[%s3 + $0x180] sm:$0xff]
    %v691 = vld [vmem:[%s3 + $0x188] sm:$0xff]
    %v692 = vld [vmem:[%s3 + $0x190] sm:$0xff]
    %v693 = vld [vmem:[%s3 + $0x198] sm:$0xff]
    %v694 = vld [vmem:[%s3 + $0x1a0] sm:$0xff]
    %v695 = vld [vmem:[%s3 + $0x1a8] sm:$0xff]
    %v696 = vld [vmem:[%s3 + $0x1b0] sm:$0xff]
    %v697 = vld [vmem:[%s3 + $0x1b8] sm:$0xff]
    %v698 = vld [vmem:[%s3 + $0x1c0] sm:$0xff]
    %v699 = vld [vmem:[%s3 + $0x1c8] sm:$0xff]
    %v700 = vld [vmem:[%s3 + $0x1d0] sm:$0xff]
    %v701 = vld [vmem:[%s3 + $0x1d8] sm:$0xff]
    %v702 = vld [vmem:[%s3 + $0x1e0] sm:$0xff]
    %v703 = vld [vmem:[%s3 + $0x1e8] sm:$0xff]
    %v704 = vld [vmem:[%s3 + $0x1f0] sm:$0xff]
    %v705 = vld [vmem:[%s3 + $0x1f8] sm:$0xff]
    %v706 = vld [vmem:[%s4] sm:$0x1]
    %v708 = vlaneseq
    %v709 = vshrl.u32 %v708, 7
    %v710 = vsub.s32 0, %v709
    %v711 = vrot.slane %v706, %v710
    %713 = vmatprep.subr.mxu0 0.0
    %714 = vmatpush1.msra.mxu0 %v657
    %715 = vmatprep.subr.mxu0 0.0
    %716 = vmatpush1.msra.mxu0 %v656
    %717 = vmatprep.subr.mxu0 0.0
    %718 = vmatpush1.msra.mxu0 %v655
    %719 = vmatprep.subr.mxu0 0.0
    %720 = vmatpush1.msra.mxu0 %v654
    %721 = vmatprep.subr.mxu0 0.0
    %722 = vmatpush1.msra.mxu0 %v653
    %723 = vmatprep.subr.mxu0 0.0
    %724 = vmatpush1.msra.mxu0 %v652
    %725 = vmatprep.subr.mxu0 0.0
    %726 = vmatpush1.msra.mxu0 %v651
    %727 = vmatprep.subr.mxu0 0.0
    %728 = vmatpush1.msra.mxu0 %v650
    %729 = vmatprep.subr.mxu0 0.0
    %730 = vmatpush1.msra.mxu0 %v649
    %731 = vmatprep.subr.mxu0 0.0
    %732 = vmatpush1.msra.mxu0 %v648
    %733 = vmatprep.subr.mxu0 0.0
    %734 = vmatpush1.msra.mxu0 %v647
    %735 = vmatprep.subr.mxu0 0.0
    %736 = vmatpush1.msra.mxu0 %v646
    %737 = vmatprep.subr.mxu0 0.0
    %738 = vmatpush1.msra.mxu0 %v645
    %739 = vmatprep.subr.mxu0 0.0
    %740 = vmatpush1.msra.mxu0 %v644
    %741 = vmatprep.subr.mxu0 0.0
    %742 = vmatpush1.msra.mxu0 %v643
    %743 = vmatprep.subr.mxu0 0.0
    %744 = vmatpush1.msra.mxu0 %v642
    %745 = vmatprep.subr.mxu0 0.0
    %746 = vmatpush2.msra.mxu0 %v673
    %747 = vmatprep.subr.mxu0 0.0
    %748 = vmatpush2.msra.mxu0 %v672
    %749 = vmatprep.subr.mxu0 0.0
    %750 = vmatpush2.msra.mxu0 %v671
    %751 = vmatprep.subr.mxu0 0.0
    %752 = vmatpush2.msra.mxu0 %v670
    %753 = vmatprep.subr.mxu0 0.0
    %754 = vmatpush2.msra.mxu0 %v669
    %755 = vmatprep.subr.mxu0 0.0
    %756 = vmatpush2.msra.mxu0 %v668
    %757 = vmatprep.subr.mxu0 0.0
    %758 = vmatpush2.msra.mxu0 %v667
    %759 = vmatprep.subr.mxu0 0.0
    %760 = vmatpush2.msra.mxu0 %v666
    %761 = vmatprep.subr.mxu0 0.0
    %762 = vmatpush2.msra.mxu0 %v665
    %763 = vmatprep.subr.mxu0 0.0
    %764 = vmatpush2.msra.mxu0 %v664
    %765 = vmatprep.subr.mxu0 0.0
    %766 = vmatpush2.msra.mxu0 %v663
    %767 = vmatprep.subr.mxu0 0.0
    %768 = vmatpush2.msra.mxu0 %v662
    %769 = vmatprep.subr.mxu0 0.0
    %770 = vmatpush2.msra.mxu0 %v661
    %771 = vmatprep.subr.mxu0 0.0
    %772 = vmatpush2.msra.mxu0 %v660
    %773 = vmatprep.subr.mxu0 0.0
    %774 = vmatpush2.msra.mxu0 %v659
    %775 = vmatprep.subr.mxu0 0.0
    %776 = vmatpush2.msra.mxu0 %v658
    %777 = vmatprep.mubr.f32.mxu0 %v635
    %778 = vmatmul.mubr.f32.gmra.mxu0 %v634
    %v779 = vpop.f32.mrf.mxu0
    %v780 = vadd.f32 %v711, %v779
    %v781 = vpop.f32.mrf.mxu0
    %782 = vmatprep.mubr.f32.mxu0 %v639
    %783 = vmatmul.mubr.f32.gmra.mxu0 %v638
    %v784 = vpop.f32.mrf.mxu0
    %v785 = vadd.f32 %v711, %v784
    %v786 = vpop.f32.mrf.mxu0
    %787 = vdwg.mxu0
    %788 = vmatprep.subr.mxu0 0.0
    %789 = vmatpush1.msra.mxu0 %v689
    %790 = vmatprep.subr.mxu0 0.0
    %791 = vmatpush1.msra.mxu0 %v688
    %792 = vmatprep.subr.mxu0 0.0
    %793 = vmatpush1.msra.mxu0 %v687
    %794 = vmatprep.subr.mxu0 0.0
    %795 = vmatpush1.msra.mxu0 %v686
    %796 = vmatprep.subr.mxu0 0.0
    %797 = vmatpush1.msra.mxu0 %v685
    %798 = vmatprep.subr.mxu0 0.0
    %799 = vmatpush1.msra.mxu0 %v684
    %800 = vmatprep.subr.mxu0 0.0
    %801 = vmatpush1.msra.mxu0 %v683
    %802 = vmatprep.subr.mxu0 0.0
    %803 = vmatpush1.msra.mxu0 %v682
    %804 = vmatprep.subr.mxu0 0.0
    %805 = vmatpush1.msra.mxu0 %v681
    %806 = vmatprep.subr.mxu0 0.0
    %807 = vmatpush1.msra.mxu0 %v680
    %808 = vmatprep.subr.mxu0 0.0
    %809 = vmatpush1.msra.mxu0 %v679
    %810 = vmatprep.subr.mxu0 0.0
    %811 = vmatpush1.msra.mxu0 %v678
    %812 = vmatprep.subr.mxu0 0.0
    %813 = vmatpush1.msra.mxu0 %v677
    %814 = vmatprep.subr.mxu0 0.0
    %815 = vmatpush1.msra.mxu0 %v676
    %816 = vmatprep.subr.mxu0 0.0
    %817 = vmatpush1.msra.mxu0 %v675
    %818 = vmatprep.subr.mxu0 0.0
    %819 = vmatpush1.msra.mxu0 %v674
    %820 = vmatprep.subr.mxu0 0.0
    %821 = vmatpush2.msra.mxu0 %v705
    %822 = vmatprep.subr.mxu0 0.0
    %823 = vmatpush2.msra.mxu0 %v704
    %824 = vmatprep.subr.mxu0 0.0
    %825 = vmatpush2.msra.mxu0 %v703
    %826 = vmatprep.subr.mxu0 0.0
    %827 = vmatpush2.msra.mxu0 %v702
    %828 = vmatprep.subr.mxu0 0.0
    %829 = vmatpush2.msra.mxu0 %v701
    %830 = vmatprep.subr.mxu0 0.0
    %831 = vmatpush2.msra.mxu0 %v700
    %832 = vmatprep.subr.mxu0 0.0
    %833 = vmatpush2.msra.mxu0 %v699
    %834 = vmatprep.subr.mxu0 0.0
    %835 = vmatpush2.msra.mxu0 %v698
    %836 = vmatprep.subr.mxu0 0.0
    %837 = vmatpush2.msra.mxu0 %v697
    %838 = vmatprep.subr.mxu0 0.0
    %839 = vmatpush2.msra.mxu0 %v696
    %840 = vmatprep.subr.mxu0 0.0
    %841 = vmatpush2.msra.mxu0 %v695
    %842 = vmatprep.subr.mxu0 0.0
    %843 = vmatpush2.msra.mxu0 %v694
    %844 = vmatprep.subr.mxu0 0.0
    %845 = vmatpush2.msra.mxu0 %v693
    %846 = vmatprep.subr.mxu0 0.0
    %847 = vmatpush2.msra.mxu0 %v692
    %848 = vmatprep.subr.mxu0 0.0
    %849 = vmatpush2.msra.mxu0 %v691
    %850 = vmatprep.subr.mxu0 0.0
    %851 = vmatpush2.msra.mxu0 %v690
    %852 = vmatprep.mubr.f32.mxu0 %v637
    %853 = vmatmul.mubr.f32.gmra.mxu0 %v636
    %v854 = vpop.f32.mrf.mxu0
    %v855 = vadd.f32 %v780, %v854
    %v856 = vpop.f32.mrf.mxu0
    %857 = vmatprep.mubr.f32.mxu0 %v641
    %858 = vmatmul.mubr.f32.gmra.mxu0 %v640
    %v859 = vpop.f32.mrf.mxu0
    %v860 = vadd.f32 %v785, %v859
    %v861 = vpop.f32.mrf.mxu0
    %862 = vdwg.mxu0
    %v863 = vmax.f32 %v855, 0.0
    %v864 = vmax.f32 %v860, 0.0
    %v865 = vld [vmem:[%s5] sm:$0xff]
    %v866 = vld [vmem:[%s5 + $0x8] sm:$0xff]
    %v867 = vld [vmem:[%s5 + $0x10] sm:$0xff]
    %v868 = vld [vmem:[%s5 + $0x18] sm:$0xff]
    %v869 = vld [vmem:[%s5 + $0x20] sm:$0xff]
    %v870 = vld [vmem:[%s5 + $0x28] sm:$0xff]
    %v871 = vld [vmem:[%s5 + $0x30] sm:$0xff]
    %v872 = vld [vmem:[%s5 + $0x38] sm:$0xff]
    %v873 = vld [vmem:[%s5 + $0x40] sm:$0xff]
    %v874 = vld [vmem:[%s5 + $0x48] sm:$0xff]
    %v875 = vld [vmem:[%s5 + $0x50] sm:$0xff]
    %v876 = vld [vmem:[%s5 + $0x58] sm:$0xff]
    %v877 = vld [vmem:[%s5 + $0x60] sm:$0xff]
    %v878 = vld [vmem:[%s5 + $0x68] sm:$0xff]
    %v879 = vld [vmem:[%s5 + $0x70] sm:$0xff]
    %v880 = vld [vmem:[%s5 + $0x78] sm:$0xff]
    %v881 = vld [vmem:[%s6] sm:$0x1]
    %v883 = vlaneseq
    %v884 = vshrl.u32 %v883, 7
    %v885 = vsub.s32 0, %v884
    %v886 = vrot.slane %v881, %v885
    %888 = vmatprep.subr.mxu0 0.0
    %889 = vmatpush1.msra.mxu0 %v880
    %890 = vmatprep.subr.mxu0 0.0
    %891 = vmatpush1.msra.mxu0 %v879
    %892 = vmatprep.subr.mxu0 0.0
    %893 = vmatpush1.msra.mxu0 %v878
    %894 = vmatprep.subr.mxu0 0.0
    %895 = vmatpush1.msra.mxu0 %v877
    %896 = vmatprep.subr.mxu0 0.0
    %897 = vmatpush1.msra.mxu0 %v876
    %898 = vmatprep.subr.mxu0 0.0
    %899 = vmatpush1.msra.mxu0 %v875
    %900 = vmatprep.subr.mxu0 0.0
    %901 = vmatpush1.msra.mxu0 %v874
    %902 = vmatprep.subr.mxu0 0.0
    %903 = vmatpush1.msra.mxu0 %v873
    %904 = vmatprep.subr.mxu0 0.0
    %905 = vmatpush1.msra.mxu0 %v872
    %906 = vmatprep.subr.mxu0 0.0
    %907 = vmatpush1.msra.mxu0 %v871
    %908 = vmatprep.subr.mxu0 0.0
    %909 = vmatpush1.msra.mxu0 %v870
    %910 = vmatprep.subr.mxu0 0.0
    %911 = vmatpush1.msra.mxu0 %v869
    %912 = vmatprep.subr.mxu0 0.0
    %913 = vmatpush1.msra.mxu0 %v868
    %914 = vmatprep.subr.mxu0 0.0
    %915 = vmatpush1.msra.mxu0 %v867
    %916 = vmatprep.subr.mxu0 0.0
    %917 = vmatpush1.msra.mxu0 %v866
    %918 = vmatprep.subr.mxu0 0.0
    %919 = vmatpush1.msra.mxu0 %v865
    %920 = vmatprep.subr.mxu0 0.0
    %921 = vmatpush2.msra.mxu0 0.0
    %922 = vmatprep.subr.mxu0 0.0
    %923 = vmatpush2.msra.mxu0 0.0
    %924 = vmatprep.subr.mxu0 0.0
    %925 = vmatpush2.msra.mxu0 0.0
    %926 = vmatprep.subr.mxu0 0.0
    %927 = vmatpush2.msra.mxu0 0.0
    %928 = vmatprep.subr.mxu0 0.0
    %929 = vmatpush2.msra.mxu0 0.0
    %930 = vmatprep.subr.mxu0 0.0
    %931 = vmatpush2.msra.mxu0 0.0
    %932 = vmatprep.subr.mxu0 0.0
    %933 = vmatpush2.msra.mxu0 0.0
    %934 = vmatprep.subr.mxu0 0.0
    %935 = vmatpush2.msra.mxu0 0.0
    %936 = vmatprep.subr.mxu0 0.0
    %937 = vmatpush2.msra.mxu0 0.0
    %938 = vmatprep.subr.mxu0 0.0
    %939 = vmatpush2.msra.mxu0 0.0
    %940 = vmatprep.subr.mxu0 0.0
    %941 = vmatpush2.msra.mxu0 0.0
    %942 = vmatprep.subr.mxu0 0.0
    %943 = vmatpush2.msra.mxu0 0.0
    %944 = vmatprep.subr.mxu0 0.0
    %945 = vmatpush2.msra.mxu0 0.0
    %946 = vmatprep.subr.mxu0 0.0
    %947 = vmatpush2.msra.mxu0 0.0
    %948 = vmatprep.subr.mxu0 0.0
    %949 = vmatpush2.msra.mxu0 0.0
    %950 = vmatprep.subr.mxu0 0.0
    %951 = vmatpush2.msra.mxu0 0.0
    %952 = vmatprep.mubr.f32.mxu0 0.0
    %953 = vmatmul.mubr.f32.gmra.mxu0 %v863
    %v954 = vpop.f32.mrf.mxu0
    %v955 = vadd.f32 %v886, %v954
    %v956 = vpop.f32.mrf.mxu0
    %957 = vmatprep.mubr.f32.mxu0 0.0
    %958 = vmatmul.mubr.f32.gmra.mxu0 %v864
    %v959 = vpop.f32.mrf.mxu0
    %v960 = vadd.f32 %v886, %v959
    %v961 = vpop.f32.mrf.mxu0
    %962 = vdwg.mxu0
    %963 = vst [vmem:[%s7] sm:$0xff] %v955
    %964 = vst [vmem:[%s7 + $0x8] sm:$0xff] %v960
    // Predicated region
    $region34: #{prober_cifar100_forward.1} parent=1 // pred_check
      _
    $region35: #{prober_cifar100_forward.1} parent=1 // pred_check_branch
      %966 = sbr.rel (0) target = $region37
    $region36: #{prober_cifar100_forward.1} parent=1 // pred_region
      _
    $region37: #{prober_cifar100_forward.1} parent=1 // pred_fallthru
      _
    // Predicated region
    $region38: #{prober_cifar100_forward.1} parent=1 // pred_check
      _
    $region39: #{prober_cifar100_forward.1} parent=1 // pred_check_branch
      %968 = sbr.rel (0) target = $region41
    $region40: #{prober_cifar100_forward.1} parent=1 // pred_region
      _
    $region41: #{prober_cifar100_forward.1} parent=1 // pred_fallthru
      _
    %969 = vsyncpa [#allocation3], 1

</llo_original>
